<compile_context>
chip_gen: v5e
topology: v5e:2x2
jax: 0.10.0
libtpu: 0.0.40
codegen_flags: <defaults>
</compile_context>

<pallas_src>
import functools
import math

import jax
import jax.numpy as jnp
from jax.experimental import pallas as pl
from jax.experimental.pallas import tpu as pltpu


def _mlp_kernel(n_linear, compute_dtype, *refs):
    """Kernel body: zT_ref, (w_ref, b_ref) * n_linear, outT_ref.

    All layers are fused: matmul + bias + tanh live in one kernel invocation with
    intermediate activations kept in vregs/VMEM.  Activations are (features, bt),
    i.e. batch on the lane axis.
    """
    zT_ref = refs[0]
    out_ref = refs[-1]
    wb_refs = refs[1:-1]

    h = zT_ref[...]                       # (in, bt), compute_dtype (bf16 or f32)
    for li in range(n_linear):
        w_ref = wb_refs[2 * li]           # (out, in)   torch layout, no transpose
        b_ref = wb_refs[2 * li + 1]       # (out, 1)    f32
        acc = jnp.dot(w_ref[...], h, preferred_element_type=jnp.float32)
        acc = acc + b_ref[...]            # f32 accumulate + f32 bias
        if li != n_linear - 1:
            h = jnp.tanh(acc).astype(compute_dtype)   # tanh in f32, matmul in bf16
        else:
            h = acc
    out_ref[...] = h.astype(out_ref.dtype)


def prepare_ode_rnn_params(params, compute_dtype=jnp.bfloat16):
    """Hoisted (once-per-model, NOT once-per-ODE-step) param preparation.

    Keeps W in torch (out, in) layout (the transposed kernel layout needs no
    weight transpose at all), casts W to the MXU compute dtype, and reshapes the
    bias to (out, 1) so it broadcasts across the batch/lane axis in f32.
    """
    prepped = []
    for w, b in params:
        prepped.append((jnp.asarray(w, compute_dtype),
                        jnp.asarray(b, jnp.float32).reshape(-1, 1)))
    return tuple(prepped)


def ode_rnn_func_forward(t, z, prepped_params, *, batch_tile=256):
    """Pallas implementation of ODERNNFunc.forward(t, z).

    t is unused (kept for signature parity with the PyTorch module).
    prepped_params: output of prepare_ode_rnn_params().
    """
    del t  # unused, just like in the PyTorch forward
    batch, hidden = z.shape
    n_linear = len(prepped_params)
    out_dim = prepped_params[-1][0].shape[0]
    compute_dtype = prepped_params[0][0].dtype

    # Pad batch (the lane axis) up to a multiple of 128 so all stores are
    # lane-dense, then make it a multiple of the tile.
    LANE = 128
    padded_batch = -(-batch // LANE) * LANE
    bt = min(batch_tile, padded_batch)
    padded_batch = -(-padded_batch // bt) * bt

    # Layout plumbing (cheap, fuses in XLA): batch onto the lane axis + dtype cast.
    zT = jnp.asarray(z, compute_dtype).T                    # (hidden, batch)
    if padded_batch != batch:
        zT = jnp.pad(zT, ((0, 0), (0, padded_batch - batch)))

    flat_args = [zT]
    in_specs = [pl.BlockSpec((hidden, bt), lambda i: (0, i))]
    for w, b in prepped_params:
        flat_args.append(w)
        flat_args.append(b)
        in_specs.append(pl.BlockSpec(w.shape, lambda i: (0, 0)))   # resident weights
        in_specs.append(pl.BlockSpec(b.shape, lambda i: (0, 0)))   # resident biases

    # Advisory cost estimate so XLA can overlap the surrounding ODE-solver ops.
    dims = [(w.shape[1], w.shape[0]) for w, _ in prepped_params]   # (in, out)
    flops = 2 * padded_batch * sum(fi * fo for fi, fo in dims)
    transcendentals = padded_batch * sum(fo for _, fo in dims[:-1])
    bytes_accessed = int(
        zT.size * jnp.dtype(zT.dtype).itemsize
        + sum(w.size * jnp.dtype(w.dtype).itemsize
              + b.size * jnp.dtype(b.dtype).itemsize
              for w, b in prepped_params)
        + out_dim * padded_batch * jnp.dtype(z.dtype).itemsize)

    kernel = functools.partial(_mlp_kernel, n_linear, compute_dtype)
    grid = (padded_batch // bt,)

    outT = pl.pallas_call(
        kernel,
        out_shape=jax.ShapeDtypeStruct((out_dim, padded_batch), z.dtype),
        grid_spec=pltpu.PrefetchScalarGridSpec(
            num_scalar_prefetch=0,
            grid=grid,
            in_specs=in_specs,
            out_specs=pl.BlockSpec((out_dim, bt), lambda i: (0, i)),
        ),
        compiler_params=pltpu.CompilerParams(
            dimension_semantics=("parallel",),     # batch-parallel: megacore-splittable
        ),
        cost_estimate=pl.CostEstimate(
            flops=flops,
            transcendentals=transcendentals,
            bytes_accessed=bytes_accessed),
    )(*flat_args)

    # Back to the module's (batch, hidden) convention; drop padding.
    return outT[:, :batch].T


def init_ode_rnn_func_params(key, hidden_channels, hidden_hidden_channels,
                             num_hidden_layers, dtype=jnp.float32):
    """Deterministic init mirroring torch.nn.Linear's default
    U(-1/sqrt(fan_in), 1/sqrt(fan_in)) for both weights and biases."""
    dims = [(hidden_channels, hidden_hidden_channels)]
    for _ in range(num_hidden_layers - 1):
        dims.append((hidden_hidden_channels, hidden_hidden_channels))
    dims.append((hidden_hidden_channels, hidden_channels))

    params = []
    for (fan_in, fan_out) in dims:
        key, kw, kb = jax.random.split(key, 3)
        bound = 1.0 / math.sqrt(fan_in)
        w = jax.random.uniform(kw, (fan_out, fan_in), dtype, -bound, bound)  # torch (out, in)
        b = jax.random.uniform(kb, (fan_out,), dtype, -bound, bound)
        params.append((w, b))
    return params


def _reference_forward(t, z, params):
    """Pure-JAX f32 reference of the PyTorch module for a correctness check."""
    del t
    h = z
    n = len(params)
    for i, (w, b) in enumerate(params):
        h = h @ w.T + b
        if i != n - 1:
            h = jnp.tanh(h)
    return h


if __name__ == "__main__":
    # Small shapes consistent with the module; batch=512 gives 2 parallel grid
    # steps (keeps both v7x TensorCores busy) at 256-row tiles.
    batch = 512
    hidden_channels = 32
    hidden_hidden_channels = 64
    num_hidden_layers = 2

    key = jax.random.PRNGKey(0)
    key, kz = jax.random.split(key)
    z = jax.random.normal(kz, (batch, hidden_channels), jnp.float32)
    t = jnp.float32(0.0)  # ignored, as in the PyTorch forward
    # TODO(synk): the module's self.nfe counter is Python-side bookkeeping, not computation.

    params = init_ode_rnn_func_params(
        key, hidden_channels, hidden_hidden_channels, num_hidden_layers)
    ref = _reference_forward(t, z, params)

    # f32 MXU path: exact-ish check against the reference.
    params_f32 = prepare_ode_rnn_params(params, compute_dtype=jnp.float32)
    out_f32 = jax.block_until_ready(
        ode_rnn_func_forward(t, z, params_f32, batch_tile=256))
    assert out_f32.shape == (batch, hidden_channels)
    assert jnp.allclose(out_f32, ref, atol=1e-5, rtol=1e-5), "f32 mismatch vs reference"

    # bf16 MXU operands (v6e/v7x fast path), f32 accumulation: looser tolerance.
    params_bf16 = prepare_ode_rnn_params(params, compute_dtype=jnp.bfloat16)
    out_bf16 = jax.block_until_ready(
        ode_rnn_func_forward(t, z, params_bf16, batch_tile=256))
    assert out_bf16.shape == (batch, hidden_channels)
    assert jnp.allclose(out_bf16, ref, atol=5e-2, rtol=5e-2), "bf16 mismatch vs reference"

    # Ragged batch (exercises pad + slice-back path).
    z_ragged = z[:200]
    out_ragged = jax.block_until_ready(
        ode_rnn_func_forward(t, z_ragged, params_bf16, batch_tile=256))
    assert out_ragged.shape == (200, hidden_channels)
    assert jnp.allclose(out_ragged, ref[:200], atol=5e-2, rtol=5e-2), "ragged mismatch"

    print("KERNEL_OK")
</pallas_src>

<mosaic_0001>
module attributes {stable_mosaic.version = 11 : i64} {
  func.func @_mlp_kernel(%arg0: i32, %arg1: memref<32x256xf32, #tpu.memory_space<vmem>>, %arg2: memref<64x32xf32, #tpu.memory_space<vmem>>, %arg3: memref<64x1xf32, #tpu.memory_space<vmem>>, %arg4: memref<64x64xf32, #tpu.memory_space<vmem>>, %arg5: memref<64x1xf32, #tpu.memory_space<vmem>>, %arg6: memref<32x64xf32, #tpu.memory_space<vmem>>, %arg7: memref<32x1xf32, #tpu.memory_space<vmem>>, %arg8: memref<32x256xf32, #tpu.memory_space<vmem>>) attributes {dimension_semantics = [#tpu.dimension_semantics<parallel>], iteration_bounds = array<i64: 2>, scalar_prefetch = 0 : i64, scratch_operands = 0 : i64, tpu.core_type = #tpu.core_type<tc>, window_params = [{transform_indices = @transform_0, window_bounds = array<i64: 32, 256>}, {pipeline_mode = #tpu.pipeline_mode<synchronous>, transform_indices = @transform_1, window_bounds = array<i64: 64, 32>}, {pipeline_mode = #tpu.pipeline_mode<synchronous>, transform_indices = @transform_2, window_bounds = array<i64: 64, 1>}, {pipeline_mode = #tpu.pipeline_mode<synchronous>, transform_indices = @transform_3, window_bounds = array<i64: 64, 64>}, {pipeline_mode = #tpu.pipeline_mode<synchronous>, transform_indices = @transform_4, window_bounds = array<i64: 64, 1>}, {pipeline_mode = #tpu.pipeline_mode<synchronous>, transform_indices = @transform_5, window_bounds = array<i64: 32, 64>}, {pipeline_mode = #tpu.pipeline_mode<synchronous>, transform_indices = @transform_6, window_bounds = array<i64: 32, 1>}, {transform_indices = @transform_7, window_bounds = array<i64: 32, 256>}]} {
    %c0 = arith.constant 0 : index
    %c0_0 = arith.constant 0 : index
    %0 = vector.load %arg1[%c0, %c0_0] : memref<32x256xf32, #tpu.memory_space<vmem>>, vector<32x256xf32>
    %c0_1 = arith.constant 0 : index
    %c0_2 = arith.constant 0 : index
    %1 = vector.load %arg2[%c0_1, %c0_2] : memref<64x32xf32, #tpu.memory_space<vmem>>, vector<64x32xf32>
    %cst = arith.constant dense<0.000000e+00> : vector<64x256xf32>
    %2 = tpu.matmul %1, %0, %cst {dimension_numbers = #tpu.dot_dimension_numbers<[1], [0], [0], [1], [0, 0, 1, 1], [], []>} : vector<64x32xf32>, vector<32x256xf32>, vector<64x256xf32> -> vector<64x256xf32>
    %c0_3 = arith.constant 0 : index
    %c0_4 = arith.constant 0 : index
    %3 = vector.load %arg3[%c0_3, %c0_4] : memref<64x1xf32, #tpu.memory_space<vmem>>, vector<64x1xf32>
    %4 = vector.broadcast %3 : vector<64x1xf32> to vector<64x256xf32>
    %5 = arith.addf %2, %4 : vector<64x256xf32>
    %6 = math.tanh %5 : vector<64x256xf32>
    %c0_5 = arith.constant 0 : index
    %c0_6 = arith.constant 0 : index
    %7 = vector.load %arg4[%c0_5, %c0_6] : memref<64x64xf32, #tpu.memory_space<vmem>>, vector<64x64xf32>
    %cst_7 = arith.constant dense<0.000000e+00> : vector<64x256xf32>
    %8 = tpu.matmul %7, %6, %cst_7 {dimension_numbers = #tpu.dot_dimension_numbers<[1], [0], [0], [1], [0, 0, 1, 1], [], []>} : vector<64x64xf32>, vector<64x256xf32>, vector<64x256xf32> -> vector<64x256xf32>
    %c0_8 = arith.constant 0 : index
    %c0_9 = arith.constant 0 : index
    %9 = vector.load %arg5[%c0_8, %c0_9] : memref<64x1xf32, #tpu.memory_space<vmem>>, vector<64x1xf32>
    %10 = vector.broadcast %9 : vector<64x1xf32> to vector<64x256xf32>
    %11 = arith.addf %8, %10 : vector<64x256xf32>
    %12 = math.tanh %11 : vector<64x256xf32>
    %c0_10 = arith.constant 0 : index
    %c0_11 = arith.constant 0 : index
    %13 = vector.load %arg6[%c0_10, %c0_11] : memref<32x64xf32, #tpu.memory_space<vmem>>, vector<32x64xf32>
    %cst_12 = arith.constant dense<0.000000e+00> : vector<32x256xf32>
    %14 = tpu.matmul %13, %12, %cst_12 {dimension_numbers = #tpu.dot_dimension_numbers<[1], [0], [0], [1], [0, 0, 1, 1], [], []>} : vector<32x64xf32>, vector<64x256xf32>, vector<32x256xf32> -> vector<32x256xf32>
    %c0_13 = arith.constant 0 : index
    %c0_14 = arith.constant 0 : index
    %15 = vector.load %arg7[%c0_13, %c0_14] : memref<32x1xf32, #tpu.memory_space<vmem>>, vector<32x1xf32>
    %16 = vector.broadcast %15 : vector<32x1xf32> to vector<32x256xf32>
    %17 = arith.addf %14, %16 : vector<32x256xf32>
    %c0_15 = arith.constant 0 : index
    %c0_16 = arith.constant 0 : index
    %18 = vector.load %arg8[%c0_15, %c0_16] : memref<32x256xf32, #tpu.memory_space<vmem>>, vector<32x256xf32>
    tpu.vector_store %arg8[%c0_15, %c0_16], %17 {strides = array<i32>} : memref<32x256xf32, #tpu.memory_space<vmem>>, vector<32x256xf32>,
    return
  }
  func.func @transform_0(%arg0: i32) -> (i32, i32) {
    %c0_i32 = arith.constant 0 : i32
    %c0_i32_0 = arith.constant 0 : i32
    return %c0_i32, %arg0 : i32, i32
  }
  func.func @transform_1(%arg0: i32) -> (i32, i32) {
    %c0_i32 = arith.constant 0 : i32
    %c0_i32_0 = arith.constant 0 : i32
    %c0_i32_1 = arith.constant 0 : i32
    return %c0_i32, %c0_i32_0 : i32, i32
  }
  func.func @transform_2(%arg0: i32) -> (i32, i32) {
    %c0_i32 = arith.constant 0 : i32
    %c0_i32_0 = arith.constant 0 : i32
    %c0_i32_1 = arith.constant 0 : i32
    return %c0_i32, %c0_i32_0 : i32, i32
  }
  func.func @transform_3(%arg0: i32) -> (i32, i32) {
    %c0_i32 = arith.constant 0 : i32
    %c0_i32_0 = arith.constant 0 : i32
    %c0_i32_1 = arith.constant 0 : i32
    return %c0_i32, %c0_i32_0 : i32, i32
  }
  func.func @transform_4(%arg0: i32) -> (i32, i32) {
    %c0_i32 = arith.constant 0 : i32
    %c0_i32_0 = arith.constant 0 : i32
    %c0_i32_1 = arith.constant 0 : i32
    return %c0_i32, %c0_i32_0 : i32, i32
  }
  func.func @transform_5(%arg0: i32) -> (i32, i32) {
    %c0_i32 = arith.constant 0 : i32
    %c0_i32_0 = arith.constant 0 : i32
    %c0_i32_1 = arith.constant 0 : i32
    return %c0_i32, %c0_i32_0 : i32, i32
  }
  func.func @transform_6(%arg0: i32) -> (i32, i32) {
    %c0_i32 = arith.constant 0 : i32
    %c0_i32_0 = arith.constant 0 : i32
    %c0_i32_1 = arith.constant 0 : i32
    return %c0_i32, %c0_i32_0 : i32, i32
  }
  func.func @transform_7(%arg0: i32) -> (i32, i32) {
    %c0_i32 = arith.constant 0 : i32
    %c0_i32_0 = arith.constant 0 : i32
    return %c0_i32, %arg0 : i32, i32
  }
}

</mosaic_0001>

<llo_original>
// kernel: tpu_custom_call.1
$region0: #{tpu_custom_call.1}
  #allocation0 [shape = 'u32[]', space=smem, size = 0x4, offset = 0x4, fixed_abs, tag = 'smem constant byte address 0x4 - core index']
  #allocation1 [shape = 'u32[72,128]{1,0:T(1,128)}', space=vmem, size = 0x9000, scoped, tag = 'internal scratch']
  %s0 = inlined_call_operand.vmem [shape: f32[32,512], index: 0, kind: input, shape index: {}]
  %s1 = inlined_call_operand.vmem [shape: f32[64,32], index: 1, kind: input, shape index: {}]
  %s2 = inlined_call_operand.vmem [shape: f32[64,1], index: 2, kind: input, shape index: {}]
  %s3 = inlined_call_operand.vmem [shape: f32[64,64], index: 3, kind: input, shape index: {}]
  %s4 = inlined_call_operand.vmem [shape: f32[64,1], index: 4, kind: input, shape index: {}]
  %s5 = inlined_call_operand.vmem [shape: f32[32,64], index: 5, kind: input, shape index: {}]
  %s6 = inlined_call_operand.vmem [shape: f32[32,1], index: 6, kind: input, shape index: {}]
  %s7 = inlined_call_operand.hbm [shape: f32[32,512], index: 7, kind: output, shape index: {}]
  %s8 = sld [smem:[#allocation0]]
  $region84: #{tpu_custom_call.1} parent=0
    _
  %s10 = ssub.s32 1, %s8
  %s11 = scalar_select 0, %s10, %s8
  $region1: #{tpu_custom_call.1} parent=0
    #allocation2 [shape = 'u8[65536]{0}', space=vmem, size = 0x10000, scoped, tag = 'input window, operand 0']
    #allocation3 [shape = 'u8[65536]{0}', space=vmem, size = 0x10000, scoped, tag = 'output window, operand 0']
    #allocation4 [shape = 's32[2]{0}', space=sflag, size = 0x8, scoped, tag = 'scoped memory for tpu_custom_call.1']
    %12 = vsyncpa [#allocation4], 0
    %s13 = scalar_lea.sflag [#allocation4], 1
    %14 = vsyncpa %s13, 0
    loop: start=0, step=1, limit=4
    $region2: #{tpu_custom_call.1} parent=1 // loop_pre_header
      _
    $region3: #{tpu_custom_call.1} parent=1 // loop_header
      %s16 = sphi 0, %s20
      %p17 = scmp.ge.s32.totalorder %s16, 4
      %s26 = sphi 0, %s28
      %s29 = sphi 0, %s26
      %s30 = sphi 0, %s29
      %s46 = sphi 0, %s30
      %s50 = sphi 0, %s50
      %s52 = sphi 0, %s50
      %s53 = sphi 0, %s52
      %s67 = sphi 0, %s53
      %s71 = sphi 0, %s71
      %s73 = sphi 0, %s71
      %s74 = sphi 0, %s73
      %s88 = sphi 0, %s74
      %s92 = sphi 0, %s92
      %s94 = sphi 0, %s92
      %s95 = sphi 0, %s94
      %s109 = sphi 0, %s95
      %s113 = sphi 0, %s113
      %s115 = sphi 0, %s113
      %s116 = sphi 0, %s115
      %s130 = sphi 0, %s116
      %s134 = sphi 0, %s134
      %s136 = sphi 0, %s134
      %s137 = sphi 0, %s136
      %s151 = sphi 0, %s137
      %s155 = sphi 0, %s155
      %s157 = sphi 0, %s155
      %s158 = sphi 0, %s157
      %s172 = sphi 0, %s158
      %s178 = sphi 0, %s180
      %s181 = sphi 0, %s178
      %s182 = sphi 0, %s181
      %s198 = sphi 0, %s182
    $region4: #{tpu_custom_call.1} parent=1 // loop_header_branch
      %19 = sbr.rel (%p17) target = $region8
    $region5: #{tpu_custom_call.1} parent=1 // loop_body
      %s21 = ssub.s32 %s16, 1
      %s22 = ssub.s32 %s16, 2
      %s23 = sadd.s32 %s16, 1
      %s24 = ssub.s32 %s16, %s23
      %p25 = scmp.eq.s32.totalorder %s24, 0
      %s27 = sadd.s32 %s26, 1
      %s28 = scalar_select %p25, %s26, %s27
      %p31 = pneg %p25
      %p32 = scmp.eq.s32.totalorder %s16, 1
      %p33 = por %p31, %p32
      %p34 = scmp.ne.s32.totalorder %s26, %s29
      %p35 = scmp.eq.s32.totalorder %s16, 0
      %p36 = por %p34, %p35
      %p37 = scmp.ne.s32.totalorder %s26, %s29
      %p38 = scmp.eq.s32.totalorder %s21, 1
      %p39 = por %p37, %p38
      %p40 = scmp.ne.s32.totalorder %s29, %s30
      %p41 = scmp.eq.s32.totalorder %s21, 0
      %p42 = por %p40, %p41
      %p43 = scmp.ne.s32.totalorder %s29, %s30
      %p44 = scmp.eq.s32.totalorder %s22, 1
      %p45 = por %p43, %p44
      %p47 = scmp.ne.s32.totalorder %s30, %s46
      %p48 = scmp.eq.s32.totalorder %s22, 0
      %p49 = por %p47, %p48
      %s51 = sadd.s32 %s50, 1
      %p54 = scmp.eq.s32.totalorder %s16, 1
      %p55 = scmp.ne.s32.totalorder %s50, %s52
      %p56 = scmp.eq.s32.totalorder %s16, 0
      %p57 = por %p55, %p56
      %p58 = scmp.ne.s32.totalorder %s50, %s52
      %p59 = scmp.eq.s32.totalorder %s21, 1
      %p60 = por %p58, %p59
      %p61 = scmp.ne.s32.totalorder %s52, %s53
      %p62 = scmp.eq.s32.totalorder %s21, 0
      %p63 = por %p61, %p62
      %p64 = scmp.ne.s32.totalorder %s52, %s53
      %p65 = scmp.eq.s32.totalorder %s22, 1
      %p66 = por %p64, %p65
      %p68 = scmp.ne.s32.totalorder %s53, %s67
      %p69 = scmp.eq.s32.totalorder %s22, 0
      %p70 = por %p68, %p69
      %s72 = sadd.s32 %s71, 1
      %p75 = scmp.eq.s32.totalorder %s16, 1
      %p76 = scmp.ne.s32.totalorder %s71, %s73
      %p77 = scmp.eq.s32.totalorder %s16, 0
      %p78 = por %p76, %p77
      %p79 = scmp.ne.s32.totalorder %s71, %s73
      %p80 = scmp.eq.s32.totalorder %s21, 1
      %p81 = por %p79, %p80
      %p82 = scmp.ne.s32.totalorder %s73, %s74
      %p83 = scmp.eq.s32.totalorder %s21, 0
      %p84 = por %p82, %p83
      %p85 = scmp.ne.s32.totalorder %s73, %s74
      %p86 = scmp.eq.s32.totalorder %s22, 1
      %p87 = por %p85, %p86
      %p89 = scmp.ne.s32.totalorder %s74, %s88
      %p90 = scmp.eq.s32.totalorder %s22, 0
      %p91 = por %p89, %p90
      %s93 = sadd.s32 %s92, 1
      %p96 = scmp.eq.s32.totalorder %s16, 1
      %p97 = scmp.ne.s32.totalorder %s92, %s94
      %p98 = scmp.eq.s32.totalorder %s16, 0
      %p99 = por %p97, %p98
      %p100 = scmp.ne.s32.totalorder %s92, %s94
      %p101 = scmp.eq.s32.totalorder %s21, 1
      %p102 = por %p100, %p101
      %p103 = scmp.ne.s32.totalorder %s94, %s95
      %p104 = scmp.eq.s32.totalorder %s21, 0
      %p105 = por %p103, %p104
      %p106 = scmp.ne.s32.totalorder %s94, %s95
      %p107 = scmp.eq.s32.totalorder %s22, 1
      %p108 = por %p106, %p107
      %p110 = scmp.ne.s32.totalorder %s95, %s109
      %p111 = scmp.eq.s32.totalorder %s22, 0
      %p112 = por %p110, %p111
      %s114 = sadd.s32 %s113, 1
      %p117 = scmp.eq.s32.totalorder %s16, 1
      %p118 = scmp.ne.s32.totalorder %s113, %s115
      %p119 = scmp.eq.s32.totalorder %s16, 0
      %p120 = por %p118, %p119
      %p121 = scmp.ne.s32.totalorder %s113, %s115
      %p122 = scmp.eq.s32.totalorder %s21, 1
      %p123 = por %p121, %p122
      %p124 = scmp.ne.s32.totalorder %s115, %s116
      %p125 = scmp.eq.s32.totalorder %s21, 0
      %p126 = por %p124, %p125
      %p127 = scmp.ne.s32.totalorder %s115, %s116
      %p128 = scmp.eq.s32.totalorder %s22, 1
      %p129 = por %p127, %p128
      %p131 = scmp.ne.s32.totalorder %s116, %s130
      %p132 = scmp.eq.s32.totalorder %s22, 0
      %p133 = por %p131, %p132
      %s135 = sadd.s32 %s134, 1
      %p138 = scmp.eq.s32.totalorder %s16, 1
      %p139 = scmp.ne.s32.totalorder %s134, %s136
      %p140 = scmp.eq.s32.totalorder %s16, 0
      %p141 = por %p139, %p140
      %p142 = scmp.ne.s32.totalorder %s134, %s136
      %p143 = scmp.eq.s32.totalorder %s21, 1
      %p144 = por %p142, %p143
      %p145 = scmp.ne.s32.totalorder %s136, %s137
      %p146 = scmp.eq.s32.totalorder %s21, 0
      %p147 = por %p145, %p146
      %p148 = scmp.ne.s32.totalorder %s136, %s137
      %p149 = scmp.eq.s32.totalorder %s22, 1
      %p150 = por %p148, %p149
      %p152 = scmp.ne.s32.totalorder %s137, %s151
      %p153 = scmp.eq.s32.totalorder %s22, 0
      %p154 = por %p152, %p153
      %s156 = sadd.s32 %s155, 1
      %p159 = scmp.eq.s32.totalorder %s16, 1
      %p160 = scmp.ne.s32.totalorder %s155, %s157
      %p161 = scmp.eq.s32.totalorder %s16, 0
      %p162 = por %p160, %p161
      %p163 = scmp.ne.s32.totalorder %s155, %s157
      %p164 = scmp.eq.s32.totalorder %s21, 1
      %p165 = por %p163, %p164
      %p166 = scmp.ne.s32.totalorder %s157, %s158
      %p167 = scmp.eq.s32.totalorder %s21, 0
      %p168 = por %p166, %p167
      %p169 = scmp.ne.s32.totalorder %s157, %s158
      %p170 = scmp.eq.s32.totalorder %s22, 1
      %p171 = por %p169, %p170
      %p173 = scmp.ne.s32.totalorder %s158, %s172
      %p174 = scmp.eq.s32.totalorder %s22, 0
      %p175 = por %p173, %p174
      %s176 = ssub.s32 %s16, %s23
      %p177 = scmp.eq.s32.totalorder %s176, 0
      %s179 = sadd.s32 %s178, 1
      %s180 = scalar_select %p177, %s178, %s179
      %p183 = pneg %p177
      %p184 = scmp.eq.s32.totalorder %s16, 1
      %p185 = por %p183, %p184
      %p186 = scmp.ne.s32.totalorder %s178, %s181
      %p187 = scmp.eq.s32.totalorder %s16, 0
      %p188 = por %p186, %p187
      %p189 = scmp.ne.s32.totalorder %s178, %s181
      %p190 = scmp.eq.s32.totalorder %s21, 1
      %p191 = por %p189, %p190
      %p192 = scmp.ne.s32.totalorder %s181, %s182
      %p193 = scmp.eq.s32.totalorder %s21, 0
      %p194 = por %p192, %p193
      %p195 = scmp.ne.s32.totalorder %s181, %s182
      %p196 = scmp.eq.s32.totalorder %s22, 1
      %p197 = por %p195, %p196
      %p199 = scmp.ne.s32.totalorder %s182, %s198
      %p200 = scmp.eq.s32.totalorder %s22, 0
      %p201 = por %p199, %p200
      %p202 = scmp.le.s32.totalorder 1, %s16
      %p203 = scmp.lt.s32.totalorder %s16, 3
      %p204 = pnand %p202, %p203
      %p205 = pneg %p204
      // Predicated region
      $region9: #{tpu_custom_call.1} parent=5 // pred_check
        _
      $region10: #{tpu_custom_call.1} parent=5 // pred_check_branch
        %207 = sbr.rel (%p204) target = $region12
      $region11: #{tpu_custom_call.1} parent=5 // pred_region
        %s208 = ssub.s32 %s16, 1
        // Predicated region
        $region13: #{tpu_custom_call.1} parent=11 // pred_check
          %p209 = pneg %p63
        $region14: #{tpu_custom_call.1} parent=11 // pred_check_branch
          %211 = sbr.rel (%p209) target = $region16
        $region15: #{tpu_custom_call.1} parent=11 // pred_region
          _
        $region16: #{tpu_custom_call.1} parent=11 // pred_fallthru
          _
        // Predicated region
        $region17: #{tpu_custom_call.1} parent=11 // pred_check
          %p212 = pneg %p84
        $region18: #{tpu_custom_call.1} parent=11 // pred_check_branch
          %214 = sbr.rel (%p212) target = $region20
        $region19: #{tpu_custom_call.1} parent=11 // pred_region
          _
        $region20: #{tpu_custom_call.1} parent=11 // pred_fallthru
          _
        // Predicated region
        $region21: #{tpu_custom_call.1} parent=11 // pred_check
          %p215 = pneg %p105
        $region22: #{tpu_custom_call.1} parent=11 // pred_check_branch
          %217 = sbr.rel (%p215) target = $region24
        $region23: #{tpu_custom_call.1} parent=11 // pred_region
          _
        $region24: #{tpu_custom_call.1} parent=11 // pred_fallthru
          _
        // Predicated region
        $region25: #{tpu_custom_call.1} parent=11 // pred_check
          %p218 = pneg %p126
        $region26: #{tpu_custom_call.1} parent=11 // pred_check_branch
          %220 = sbr.rel (%p218) target = $region28
        $region27: #{tpu_custom_call.1} parent=11 // pred_region
          _
        $region28: #{tpu_custom_call.1} parent=11 // pred_fallthru
          _
        // Predicated region
        $region29: #{tpu_custom_call.1} parent=11 // pred_check
          %p221 = pneg %p147
        $region30: #{tpu_custom_call.1} parent=11 // pred_check_branch
          %223 = sbr.rel (%p221) target = $region32
        $region31: #{tpu_custom_call.1} parent=11 // pred_region
          _
        $region32: #{tpu_custom_call.1} parent=11 // pred_fallthru
          _
        // Predicated region
        $region33: #{tpu_custom_call.1} parent=11 // pred_check
          %p224 = pneg %p168
        $region34: #{tpu_custom_call.1} parent=11 // pred_check_branch
          %226 = sbr.rel (%p224) target = $region36
        $region35: #{tpu_custom_call.1} parent=11 // pred_region
          _
        $region36: #{tpu_custom_call.1} parent=11 // pred_fallthru
          _
      $region12: #{tpu_custom_call.1} parent=5 // pred_fallthru
        _
      %p227 = scmp.lt.s32.totalorder %s16, 2
      // Predicated region
      $region37: #{tpu_custom_call.1} parent=5 // pred_check
        %p228 = pneg %p227
      $region38: #{tpu_custom_call.1} parent=5 // pred_check_branch
        %230 = sbr.rel (%p228) target = $region40
      $region39: #{tpu_custom_call.1} parent=5 // pred_region
        // Predicated region
        $region41: #{tpu_custom_call.1} parent=39 // pred_check
          %p231 = pneg %p36
        $region42: #{tpu_custom_call.1} parent=39 // pred_check_branch
          %233 = sbr.rel (%p231) target = $region44
        $region43: #{tpu_custom_call.1} parent=39 // pred_region
          %s234 = sand.u32 %s26, 1
          %s235 = sand.u32 %s26, 1
          %s236 = smul.addr %s235, 64
          %s237 = scalar_lea.vmem [#allocation2], %s236
          %s238 = smul.u32 2, %s16
          %s239 = smul.addr %s238, 8
          %s240 = scalar_lea.vmem %s0, %s239
          // Predicated region
          $region45: #{tpu_custom_call.1} parent=43 // pred_check
            _
          $region46: #{tpu_custom_call.1} parent=43 // pred_check_branch
            %242 = sbr.rel (0) target = $region48
          $region47: #{tpu_custom_call.1} parent=43 // pred_region
            // Predicated region
            $region49: #{tpu_custom_call.1} parent=47 // pred_check
              _
            $region50: #{tpu_custom_call.1} parent=47 // pred_check_branch
              %244 = sbr.rel (0) target = $region52
            $region51: #{tpu_custom_call.1} parent=47 // pred_region
              loop: start=0, step=1, limit=1
              $region53: #{tpu_custom_call.1} parent=51 // loop_pre_header
                _
              $region54: #{tpu_custom_call.1} parent=51 // loop_header
                %s246 = sphi 0, %s250
                %p247 = scmp.ge.s32.totalorder %s246, 1
                %s251 = sphi %s240, %s240
                %s252 = sphi %s237, %s237
              $region55: #{tpu_custom_call.1} parent=51 // loop_header_branch
                %249 = sbr.rel (%p247) target = $region59
              $region56: #{tpu_custom_call.1} parent=51 // loop_body
                %v253 = vld [vmem:[%s251] sm:$0xff]
                %254 = vst [vmem:[%s252] sm:$0xff] %v253
                %v255 = vld [vmem:[%s251 + $0x8] sm:$0xff]
                %256 = vst [vmem:[%s252 + $0x8] sm:$0xff] %v255
                %v257 = vld [vmem:[%s251 + $0x20] sm:$0xff]
                %258 = vst [vmem:[%s252 + $0x10] sm:$0xff] %v257
                %v259 = vld [vmem:[%s251 + $0x28] sm:$0xff]
                %260 = vst [vmem:[%s252 + $0x18] sm:$0xff] %v259
                %v261 = vld [vmem:[%s251 + $0x40] sm:$0xff]
                %262 = vst [vmem:[%s252 + $0x20] sm:$0xff] %v261
                %v263 = vld [vmem:[%s251 + $0x48] sm:$0xff]
                %264 = vst [vmem:[%s252 + $0x28] sm:$0xff] %v263
                %v265 = vld [vmem:[%s251 + $0x60] sm:$0xff]
                %266 = vst [vmem:[%s252 + $0x30] sm:$0xff] %v265
                %v267 = vld [vmem:[%s251 + $0x68] sm:$0xff]
                %268 = vst [vmem:[%s252 + $0x38] sm:$0xff] %v267
              $region57: #{tpu_custom_call.1} parent=51 // loop_footer
                %s250 = sadd.s32 1, %s246
              $region58: #{tpu_custom_call.1} parent=51 // loop_footer_branch
                %245 = sbr.rel target = $region54
              $region59: #{tpu_custom_call.1} parent=51 // loop_exit
                _
            $region52: #{tpu_custom_call.1} parent=47 // pred_fallthru
              _
            // Predicated region
            $region60: #{tpu_custom_call.1} parent=47 // pred_check
              _
            $region61: #{tpu_custom_call.1} parent=47 // pred_check_branch
              %270 = sbr.rel target = $region63
            $region62: #{tpu_custom_call.1} parent=47 // pred_region
              _
            $region63: #{tpu_custom_call.1} parent=47 // pred_fallthru
              _
          $region48: #{tpu_custom_call.1} parent=43 // pred_fallthru
            _
          %271 = vnop
        $region44: #{tpu_custom_call.1} parent=39 // pred_fallthru
          _
      $region40: #{tpu_custom_call.1} parent=5 // pred_fallthru
        _
      %p272 = scmp.le.s32.totalorder 1, %s16
      %p273 = scmp.lt.s32.totalorder %s16, 3
      %p274 = pnand %p272, %p273
      %p275 = pneg %p274
      // Predicated region
      $region64: #{tpu_custom_call.1} parent=5 // pred_check
        _
      $region65: #{tpu_custom_call.1} parent=5 // pred_check_branch
        %277 = sbr.rel (%p274) target = $region67
      $region66: #{tpu_custom_call.1} parent=5 // pred_region
        %s278 = ssub.s32 %s16, 1
        %s279 = sand.u32 %s29, 1
        %s280 = sand.u32 %s29, 1
        %s281 = smul.addr %s280, 64
        %s282 = scalar_lea.vmem [#allocation2], %s281
        // Predicated region
        $region68: #{tpu_custom_call.1} parent=66 // pred_check
          %p283 = pneg %p42
        $region69: #{tpu_custom_call.1} parent=66 // pred_check_branch
          %285 = sbr.rel (%p283) target = $region71
        $region70: #{tpu_custom_call.1} parent=66 // pred_region
          _
        $region71: #{tpu_custom_call.1} parent=66 // pred_fallthru
          _
        %s286 = sand.u32 %s29, 1
        %s287 = sand.u32 %s29, 1
        %s288 = smul.addr %s287, 64
        %s289 = scalar_lea.vmem [#allocation2], %s288
        %p290 = pneg %p42
        %p291 = pneg %p39
        %p292 = pneg %p63
        %p293 = pneg %p60
        %p294 = pneg %p84
        %p295 = pneg %p81
        %p296 = pneg %p105
        %p297 = pneg %p102
        %p298 = pneg %p126
        %p299 = pneg %p123
        %p300 = pneg %p147
        %p301 = pneg %p144
        %p302 = pneg %p168
        %p303 = pneg %p165
        %p304 = pneg %p194
        %p305 = pneg %p191
        %s306 = sand.u32 %s181, 1
        %s307 = scalar_lea.sflag [#allocation4], %s306
        %s308 = sand.u32 %s181, 1
        %s309 = smul.addr %s308, 64
        %s310 = scalar_lea.vmem [#allocation3], %s309
        %s311 = smul.u32 2, %s21
        %s312 = smul.u32 2, %s21
        %v313 = vld [vmem:[%s282] sm:$0xff]
        %v314 = vld [vmem:[%s282 + $0x8] sm:$0xff]
        %v315 = vld [vmem:[%s282 + $0x10] sm:$0xff]
        %v316 = vld [vmem:[%s282 + $0x18] sm:$0xff]
        %v317 = vld [vmem:[%s282 + $0x20] sm:$0xff]
        %v318 = vld [vmem:[%s282 + $0x28] sm:$0xff]
        %v319 = vld [vmem:[%s282 + $0x30] sm:$0xff]
        %v320 = vld [vmem:[%s282 + $0x38] sm:$0xff]
        %v321 = vld [vmem:[%s1] sm:$0xff]
        %v322 = vld [vmem:[%s1 + $0x8] sm:$0xff]
        %v323 = vld [vmem:[%s1 + $0x10] sm:$0xff]
        %v324 = vld [vmem:[%s1 + $0x18] sm:$0xff]
        %v325 = vld [vmem:[%s1 + $0x20] sm:$0xff]
        %v326 = vld [vmem:[%s1 + $0x28] sm:$0xff]
        %v327 = vld [vmem:[%s1 + $0x30] sm:$0xff]
        %v328 = vld [vmem:[%s1 + $0x38] sm:$0xff]
        %v329 = vld [vmem:[%s2] sm:$0xff]
        %v330 = vld [vmem:[%s2 + $0x8] sm:$0xff]
        %v331 = vld [vmem:[%s2 + $0x10] sm:$0xff]
        %v332 = vld [vmem:[%s2 + $0x18] sm:$0xff]
        %v333 = vld [vmem:[%s2 + $0x20] sm:$0xff]
        %v334 = vld [vmem:[%s2 + $0x28] sm:$0xff]
        %v335 = vld [vmem:[%s2 + $0x30] sm:$0xff]
        %v336 = vld [vmem:[%s2 + $0x38] sm:$0xff]
        %338 = vset.pattern.permute.xlu0 0
        %339 = vperm.xlu0 %338, %v329
        %v340 = vpop.permute.xlu0 %339
        %343 = vset.pattern.permute.xlu0 0
        %344 = vperm.xlu0 %343, %v330
        %v345 = vpop.permute.xlu0 %344
        %348 = vset.pattern.permute.xlu0 0
        %349 = vperm.xlu0 %348, %v331
        %v350 = vpop.permute.xlu0 %349
        %353 = vset.pattern.permute.xlu0 0
        %354 = vperm.xlu0 %353, %v332
        %v355 = vpop.permute.xlu0 %354
        %358 = vset.pattern.permute.xlu0 0
        %359 = vperm.xlu0 %358, %v333
        %v360 = vpop.permute.xlu0 %359
        %363 = vset.pattern.permute.xlu0 0
        %364 = vperm.xlu0 %363, %v334
        %v365 = vpop.permute.xlu0 %364
        %368 = vset.pattern.permute.xlu0 0
        %369 = vperm.xlu0 %368, %v335
        %v370 = vpop.permute.xlu0 %369
        %373 = vset.pattern.permute.xlu0 0
        %374 = vperm.xlu0 %373, %v336
        %v375 = vpop.permute.xlu0 %374
        %vm377 = vcmask 261120
        %v379 = vsel %vm377, %v321, 0
        %v382 = vsel %vm377, %v322, 0
        %v385 = vsel %vm377, %v323, 0
        %v388 = vsel %vm377, %v324, 0
        %v391 = vsel %vm377, %v325, 0
        %v394 = vsel %vm377, %v326, 0
        %v397 = vsel %vm377, %v327, 0
        %v400 = vsel %vm377, %v328, 0
        %402 = vmatpush.msra.mxu0 0.0
        %403 = vmatpush.msra.mxu0 0.0
        %404 = vmatpush.msra.mxu0 0.0
        %405 = vmatpush.msra.mxu0 0.0
        %406 = vmatpush.msra.mxu0 0.0
        %407 = vmatpush.msra.mxu0 0.0
        %408 = vmatpush.msra.mxu0 0.0
        %409 = vmatpush.msra.mxu0 0.0
        %410 = vmatpush.msra.mxu0 0.0
        %411 = vmatpush.msra.mxu0 0.0
        %412 = vmatpush.msra.mxu0 0.0
        %413 = vmatpush.msra.mxu0 0.0
        %414 = vmatpush.msra.mxu0 %v319
        %415 = vmatpush.msra.mxu0 %v317
        %416 = vmatpush.msra.mxu0 %v315
        %417 = vmatpush.msra.mxu0 %v313
        %418 = vmatmul.f32.gmra.mxu0 %v379
        %v419 = vpop.f32.mrf.mxu0
        %v420 = vadd.f32 %v340, %v419
        %421 = vmatmul.f32.gmra.mxu0 %v382
        %v422 = vpop.f32.mrf.mxu0
        %v423 = vadd.f32 %v345, %v422
        %424 = vmatmul.f32.gmra.mxu0 %v385
        %v425 = vpop.f32.mrf.mxu0
        %v426 = vadd.f32 %v350, %v425
        %427 = vmatmul.f32.gmra.mxu0 %v388
        %v428 = vpop.f32.mrf.mxu0
        %v429 = vadd.f32 %v355, %v428
        %430 = vmatmul.f32.gmra.mxu0 %v391
        %v431 = vpop.f32.mrf.mxu0
        %v432 = vadd.f32 %v360, %v431
        %433 = vmatmul.f32.gmra.mxu0 %v394
        %v434 = vpop.f32.mrf.mxu0
        %v435 = vadd.f32 %v365, %v434
        %436 = vmatmul.f32.gmra.mxu0 %v397
        %v437 = vpop.f32.mrf.mxu0
        %v438 = vadd.f32 %v370, %v437
        %439 = vmatmul.f32.gmra.mxu0 %v400
        %v440 = vpop.f32.mrf.mxu0
        %v441 = vadd.f32 %v375, %v440
        %442 = vdwg.mxu0
        %443 = vmatpush.msra.mxu0 0.0
        %444 = vmatpush.msra.mxu0 0.0
        %445 = vmatpush.msra.mxu0 0.0
        %446 = vmatpush.msra.mxu0 0.0
        %447 = vmatpush.msra.mxu0 0.0
        %448 = vmatpush.msra.mxu0 0.0
        %449 = vmatpush.msra.mxu0 0.0
        %450 = vmatpush.msra.mxu0 0.0
        %451 = vmatpush.msra.mxu0 0.0
        %452 = vmatpush.msra.mxu0 0.0
        %453 = vmatpush.msra.mxu0 0.0
        %454 = vmatpush.msra.mxu0 0.0
        %455 = vmatpush.msra.mxu0 %v320
        %456 = vmatpush.msra.mxu0 %v318
        %457 = vmatpush.msra.mxu0 %v316
        %458 = vmatpush.msra.mxu0 %v314
        %459 = vmatmul.f32.gmra.mxu0 %v379
        %v460 = vpop.f32.mrf.mxu0
        %v461 = vadd.f32 %v340, %v460
        %462 = vmatmul.f32.gmra.mxu0 %v382
        %v463 = vpop.f32.mrf.mxu0
        %v464 = vadd.f32 %v345, %v463
        %465 = vmatmul.f32.gmra.mxu0 %v385
        %v466 = vpop.f32.mrf.mxu0
        %v467 = vadd.f32 %v350, %v466
        %468 = vmatmul.f32.gmra.mxu0 %v388
        %v469 = vpop.f32.mrf.mxu0
        %v470 = vadd.f32 %v355, %v469
        %471 = vmatmul.f32.gmra.mxu0 %v391
        %v472 = vpop.f32.mrf.mxu0
        %v473 = vadd.f32 %v360, %v472
        %474 = vmatmul.f32.gmra.mxu0 %v394
        %v475 = vpop.f32.mrf.mxu0
        %v476 = vadd.f32 %v365, %v475
        %477 = vmatmul.f32.gmra.mxu0 %v397
        %v478 = vpop.f32.mrf.mxu0
        %v479 = vadd.f32 %v370, %v478
        %480 = vmatmul.f32.gmra.mxu0 %v400
        %v481 = vpop.f32.mrf.mxu0
        %v482 = vadd.f32 %v375, %v481
        %483 = vdwg.mxu0
        %v484 = vtanh.pop %v420
        %v485 = vtanh.pop %v461
        %v486 = vtanh.pop %v423
        %v487 = vtanh.pop %v464
        %v488 = vtanh.pop %v426
        %v489 = vtanh.pop %v467
        %v490 = vtanh.pop %v429
        %v491 = vtanh.pop %v470
        %v492 = vtanh.pop %v432
        %v493 = vtanh.pop %v473
        %v494 = vtanh.pop %v435
        %v495 = vtanh.pop %v476
        %v496 = vtanh.pop %v438
        %v497 = vtanh.pop %v479
        %v498 = vtanh.pop %v441
        %v499 = vtanh.pop %v482
        %v500 = vld [vmem:[%s3] sm:$0xff]
        %v501 = vld [vmem:[%s3 + $0x8] sm:$0xff]
        %v502 = vld [vmem:[%s3 + $0x10] sm:$0xff]
        %v503 = vld [vmem:[%s3 + $0x18] sm:$0xff]
        %v504 = vld [vmem:[%s3 + $0x20] sm:$0xff]
        %v505 = vld [vmem:[%s3 + $0x28] sm:$0xff]
        %v506 = vld [vmem:[%s3 + $0x30] sm:$0xff]
        %v507 = vld [vmem:[%s3 + $0x38] sm:$0xff]
        %v508 = vld [vmem:[%s4] sm:$0xff]
        %v509 = vld [vmem:[%s4 + $0x8] sm:$0xff]
        %v510 = vld [vmem:[%s4 + $0x10] sm:$0xff]
        %v511 = vld [vmem:[%s4 + $0x18] sm:$0xff]
        %v512 = vld [vmem:[%s4 + $0x20] sm:$0xff]
        %v513 = vld [vmem:[%s4 + $0x28] sm:$0xff]
        %v514 = vld [vmem:[%s4 + $0x30] sm:$0xff]
        %v515 = vld [vmem:[%s4 + $0x38] sm:$0xff]
        %517 = vset.pattern.permute.xlu0 0
        %518 = vperm.xlu0 %517, %v508
        %v519 = vpop.permute.xlu0 %518
        %522 = vset.pattern.permute.xlu0 0
        %523 = vperm.xlu0 %522, %v509
        %v524 = vpop.permute.xlu0 %523
        %527 = vset.pattern.permute.xlu0 0
        %528 = vperm.xlu0 %527, %v510
        %v529 = vpop.permute.xlu0 %528
        %532 = vset.pattern.permute.xlu0 0
        %533 = vperm.xlu0 %532, %v511
        %v534 = vpop.permute.xlu0 %533
        %537 = vset.pattern.permute.xlu0 0
        %538 = vperm.xlu0 %537, %v512
        %v539 = vpop.permute.xlu0 %538
        %542 = vset.pattern.permute.xlu0 0
        %543 = vperm.xlu0 %542, %v513
        %v544 = vpop.permute.xlu0 %543
        %547 = vset.pattern.permute.xlu0 0
        %548 = vperm.xlu0 %547, %v514
        %v549 = vpop.permute.xlu0 %548
        %552 = vset.pattern.permute.xlu0 0
        %553 = vperm.xlu0 %552, %v515
        %v554 = vpop.permute.xlu0 %553
        %vm556 = vcmask 523264
        %v558 = vsel %vm556, %v500, 0
        %v561 = vsel %vm556, %v501, 0
        %v564 = vsel %vm556, %v502, 0
        %v567 = vsel %vm556, %v503, 0
        %v570 = vsel %vm556, %v504, 0
        %v573 = vsel %vm556, %v505, 0
        %v576 = vsel %vm556, %v506, 0
        %v579 = vsel %vm556, %v507, 0
        %581 = vmatpush.msra.mxu0 0.0
        %582 = vmatpush.msra.mxu0 0.0
        %583 = vmatpush.msra.mxu0 0.0
        %584 = vmatpush.msra.mxu0 0.0
        %585 = vmatpush.msra.mxu0 0.0
        %586 = vmatpush.msra.mxu0 0.0
        %587 = vmatpush.msra.mxu0 0.0
        %588 = vmatpush.msra.mxu0 0.0
        %589 = vmatpush.msra.mxu0 %v498
        %590 = vmatpush.msra.mxu0 %v496
        %591 = vmatpush.msra.mxu0 %v494
        %592 = vmatpush.msra.mxu0 %v492
        %593 = vmatpush.msra.mxu0 %v490
        %594 = vmatpush.msra.mxu0 %v488
        %595 = vmatpush.msra.mxu0 %v486
        %596 = vmatpush.msra.mxu0 %v484
        %597 = vmatmul.f32.gmra.mxu0 %v558
        %v598 = vpop.f32.mrf.mxu0
        %v599 = vadd.f32 %v519, %v598
        %600 = vmatmul.f32.gmra.mxu0 %v561
        %v601 = vpop.f32.mrf.mxu0
        %v602 = vadd.f32 %v524, %v601
        %603 = vmatmul.f32.gmra.mxu0 %v564
        %v604 = vpop.f32.mrf.mxu0
        %v605 = vadd.f32 %v529, %v604
        %606 = vmatmul.f32.gmra.mxu0 %v567
        %v607 = vpop.f32.mrf.mxu0
        %v608 = vadd.f32 %v534, %v607
        %609 = vmatmul.f32.gmra.mxu0 %v570
        %v610 = vpop.f32.mrf.mxu0
        %v611 = vadd.f32 %v539, %v610
        %612 = vmatmul.f32.gmra.mxu0 %v573
        %v613 = vpop.f32.mrf.mxu0
        %v614 = vadd.f32 %v544, %v613
        %615 = vmatmul.f32.gmra.mxu0 %v576
        %v616 = vpop.f32.mrf.mxu0
        %v617 = vadd.f32 %v549, %v616
        %618 = vmatmul.f32.gmra.mxu0 %v579
        %v619 = vpop.f32.mrf.mxu0
        %v620 = vadd.f32 %v554, %v619
        %621 = vdwg.mxu0
        %622 = vmatpush.msra.mxu0 0.0
        %623 = vmatpush.msra.mxu0 0.0
        %624 = vmatpush.msra.mxu0 0.0
        %625 = vmatpush.msra.mxu0 0.0
        %626 = vmatpush.msra.mxu0 0.0
        %627 = vmatpush.msra.mxu0 0.0
        %628 = vmatpush.msra.mxu0 0.0
        %629 = vmatpush.msra.mxu0 0.0
        %630 = vmatpush.msra.mxu0 %v499
        %631 = vmatpush.msra.mxu0 %v497
        %632 = vmatpush.msra.mxu0 %v495
        %633 = vmatpush.msra.mxu0 %v493
        %634 = vmatpush.msra.mxu0 %v491
        %635 = vmatpush.msra.mxu0 %v489
        %636 = vmatpush.msra.mxu0 %v487
        %637 = vmatpush.msra.mxu0 %v485
        %638 = vmatmul.f32.gmra.mxu0 %v558
        %v639 = vpop.f32.mrf.mxu0
        %v640 = vadd.f32 %v519, %v639
        %641 = vmatmul.f32.gmra.mxu0 %v561
        %v642 = vpop.f32.mrf.mxu0
        %v643 = vadd.f32 %v524, %v642
        %644 = vmatmul.f32.gmra.mxu0 %v564
        %v645 = vpop.f32.mrf.mxu0
        %v646 = vadd.f32 %v529, %v645
        %647 = vmatmul.f32.gmra.mxu0 %v567
        %v648 = vpop.f32.mrf.mxu0
        %v649 = vadd.f32 %v534, %v648
        %650 = vmatmul.f32.gmra.mxu0 %v570
        %v651 = vpop.f32.mrf.mxu0
        %v652 = vadd.f32 %v539, %v651
        %653 = vmatmul.f32.gmra.mxu0 %v573
        %v654 = vpop.f32.mrf.mxu0
        %v655 = vadd.f32 %v544, %v654
        %656 = vmatmul.f32.gmra.mxu0 %v576
        %v657 = vpop.f32.mrf.mxu0
        %v658 = vadd.f32 %v549, %v657
        %659 = vmatmul.f32.gmra.mxu0 %v579
        %v660 = vpop.f32.mrf.mxu0
        %v661 = vadd.f32 %v554, %v660
        %662 = vdwg.mxu0
        %v663 = vtanh.pop %v599
        %v664 = vtanh.pop %v640
        %v665 = vtanh.pop %v602
        %v666 = vtanh.pop %v643
        %v667 = vtanh.pop %v605
        %v668 = vtanh.pop %v646
        %v669 = vtanh.pop %v608
        %v670 = vtanh.pop %v649
        %v671 = vtanh.pop %v611
        %v672 = vtanh.pop %v652
        %v673 = vtanh.pop %v614
        %v674 = vtanh.pop %v655
        %v675 = vtanh.pop %v617
        %v676 = vtanh.pop %v658
        %v677 = vtanh.pop %v620
        %v678 = vtanh.pop %v661
        %v679 = vld [vmem:[%s5] sm:$0xff]
        %v680 = vld [vmem:[%s5 + $0x8] sm:$0xff]
        %v681 = vld [vmem:[%s5 + $0x10] sm:$0xff]
        %v682 = vld [vmem:[%s5 + $0x18] sm:$0xff]
        %v683 = vld [vmem:[%s6] sm:$0xff]
        %v684 = vld [vmem:[%s6 + $0x8] sm:$0xff]
        %v685 = vld [vmem:[%s6 + $0x10] sm:$0xff]
        %v686 = vld [vmem:[%s6 + $0x18] sm:$0xff]
        %688 = vset.pattern.permute.xlu0 0
        %689 = vperm.xlu0 %688, %v683
        %v690 = vpop.permute.xlu0 %689
        %693 = vset.pattern.permute.xlu0 0
        %694 = vperm.xlu0 %693, %v684
        %v695 = vpop.permute.xlu0 %694
        %698 = vset.pattern.permute.xlu0 0
        %699 = vperm.xlu0 %698, %v685
        %v700 = vpop.permute.xlu0 %699
        %703 = vset.pattern.permute.xlu0 0
        %704 = vperm.xlu0 %703, %v686
        %v705 = vpop.permute.xlu0 %704
        %v708 = vsel %vm556, %v679, 0
        %v711 = vsel %vm556, %v680, 0
        %v714 = vsel %vm556, %v681, 0
        %v717 = vsel %vm556, %v682, 0
        %719 = vmatpush.msra.mxu0 0.0
        %720 = vmatpush.msra.mxu0 0.0
        %721 = vmatpush.msra.mxu0 0.0
        %722 = vmatpush.msra.mxu0 0.0
        %723 = vmatpush.msra.mxu0 0.0
        %724 = vmatpush.msra.mxu0 0.0
        %725 = vmatpush.msra.mxu0 0.0
        %726 = vmatpush.msra.mxu0 0.0
        %727 = vmatpush.msra.mxu0 %v677
        %728 = vmatpush.msra.mxu0 %v675
        %729 = vmatpush.msra.mxu0 %v673
        %730 = vmatpush.msra.mxu0 %v671
        %731 = vmatpush.msra.mxu0 %v669
        %732 = vmatpush.msra.mxu0 %v667
        %733 = vmatpush.msra.mxu0 %v665
        %734 = vmatpush.msra.mxu0 %v663
        %735 = vmatmul.f32.gmra.mxu0 %v708
        %v736 = vpop.f32.mrf.mxu0
        %v737 = vadd.f32 %v690, %v736
        %738 = vmatmul.f32.gmra.mxu0 %v711
        %v739 = vpop.f32.mrf.mxu0
        %v740 = vadd.f32 %v695, %v739
        %741 = vmatmul.f32.gmra.mxu0 %v714
        %v742 = vpop.f32.mrf.mxu0
        %v743 = vadd.f32 %v700, %v742
        %744 = vmatmul.f32.gmra.mxu0 %v717
        %v745 = vpop.f32.mrf.mxu0
        %v746 = vadd.f32 %v705, %v745
        %747 = vdwg.mxu0
        %748 = vmatpush.msra.mxu0 0.0
        %749 = vmatpush.msra.mxu0 0.0
        %750 = vmatpush.msra.mxu0 0.0
        %751 = vmatpush.msra.mxu0 0.0
        %752 = vmatpush.msra.mxu0 0.0
        %753 = vmatpush.msra.mxu0 0.0
        %754 = vmatpush.msra.mxu0 0.0
        %755 = vmatpush.msra.mxu0 0.0
        %756 = vmatpush.msra.mxu0 %v678
        %757 = vmatpush.msra.mxu0 %v676
        %758 = vmatpush.msra.mxu0 %v674
        %759 = vmatpush.msra.mxu0 %v672
        %760 = vmatpush.msra.mxu0 %v670
        %761 = vmatpush.msra.mxu0 %v668
        %762 = vmatpush.msra.mxu0 %v666
        %763 = vmatpush.msra.mxu0 %v664
        %764 = vmatmul.f32.gmra.mxu0 %v708
        %v765 = vpop.f32.mrf.mxu0
        %v766 = vadd.f32 %v690, %v765
        %767 = vmatmul.f32.gmra.mxu0 %v711
        %v768 = vpop.f32.mrf.mxu0
        %v769 = vadd.f32 %v695, %v768
        %770 = vmatmul.f32.gmra.mxu0 %v714
        %v771 = vpop.f32.mrf.mxu0
        %v772 = vadd.f32 %v700, %v771
        %773 = vmatmul.f32.gmra.mxu0 %v717
        %v774 = vpop.f32.mrf.mxu0
        %v775 = vadd.f32 %v705, %v774
        %776 = vdwg.mxu0
        %777 = vst [vmem:[%s310] sm:$0xff] %v737
        %778 = vst [vmem:[%s310 + $0x8] sm:$0xff] %v766
        %779 = vst [vmem:[%s310 + $0x10] sm:$0xff] %v740
        %780 = vst [vmem:[%s310 + $0x18] sm:$0xff] %v769
        %781 = vst [vmem:[%s310 + $0x20] sm:$0xff] %v743
        %782 = vst [vmem:[%s310 + $0x28] sm:$0xff] %v772
        %783 = vst [vmem:[%s310 + $0x30] sm:$0xff] %v746
        %784 = vst [vmem:[%s310 + $0x38] sm:$0xff] %v775
        %s785 = sand.u32 %s181, 1
        %s786 = scalar_lea.sflag [#allocation4], %s785
        %s787 = sand.u32 %s181, 1
        %s788 = smul.addr %s787, 64
        %s789 = scalar_lea.vmem [#allocation3], %s788
        // Predicated region
        $region72: #{tpu_custom_call.1} parent=66 // pred_check
          %p790 = pneg %p191
        $region73: #{tpu_custom_call.1} parent=66 // pred_check_branch
          %792 = sbr.rel (%p790) target = $region75
        $region74: #{tpu_custom_call.1} parent=66 // pred_region
          %s793 = smul.u32 2, %s21
          %795 = vsyncadd %s786, 0
          %s796 = smul.addr %s793, 8
          %s797 = scalar_lea.hbm %s7, %s796
          %s798 = sshll.u32 %s789, 4
          %s799 = int_to_ptr.vmem [resolvable:$true] %s798
          %s800 = sshll.u32 %s797, 4
          %s801 = int_to_ptr.hbm [resolvable:$true] %s800
          %806 = dma.vmem_to_hbm [thread:$0]  %s799, 1024, %s801, %s786, 256, 512, 16
        $region75: #{tpu_custom_call.1} parent=66 // pred_fallthru
          _
      $region67: #{tpu_custom_call.1} parent=5 // pred_fallthru
        _
      %p807 = scmp.le.s32.totalorder 2, %s16
      // Predicated region
      $region76: #{tpu_custom_call.1} parent=5 // pred_check
        %p808 = pneg %p807
      $region77: #{tpu_custom_call.1} parent=5 // pred_check_branch
        %810 = sbr.rel (%p808) target = $region79
      $region78: #{tpu_custom_call.1} parent=5 // pred_region
        %s811 = ssub.s32 %s16, 2
        // Predicated region
        $region80: #{tpu_custom_call.1} parent=78 // pred_check
          %p812 = pneg %p197
        $region81: #{tpu_custom_call.1} parent=78 // pred_check_branch
          %814 = sbr.rel (%p812) target = $region83
        $region82: #{tpu_custom_call.1} parent=78 // pred_region
          %s815 = sand.u32 %s182, 1
          %s816 = scalar_lea.sflag [#allocation4], %s815
          %s817 = sand.u32 %s182, 1
          %s818 = smul.addr %s817, 64
          %s819 = scalar_lea.vmem [#allocation3], %s818
          %821 = dma.done %s816, 1024
        $region83: #{tpu_custom_call.1} parent=78 // pred_fallthru
          _
      $region79: #{tpu_custom_call.1} parent=5 // pred_fallthru
        _
    $region6: #{tpu_custom_call.1} parent=1 // loop_footer
      %s20 = sadd.s32 1, %s16
    $region7: #{tpu_custom_call.1} parent=1 // loop_footer_branch
      %15 = sbr.rel target = $region3
    $region8: #{tpu_custom_call.1} parent=1 // loop_exit
      _
    %822 = vsyncpa [#allocation4], 1
    %s823 = scalar_lea.sflag [#allocation4], 1
    %824 = vsyncpa %s823, 1

</llo_original>
